<compile_context>
chip_gen: v5e
topology: v5e:2x2
jax: 0.10.0
libtpu: 0.0.40
codegen_flags: <defaults>
</compile_context>

<pallas_src>
import functools

import jax
import jax.numpy as jnp
from jax.experimental import pallas as pl
from jax.experimental.pallas import tpu as pltpu

LANES = 128
SUBLANES = 8


def _round_up(x, m):
    return ((x + m - 1) // m) * m


def _make_stats_kernel(tile_rows):
    groups = tile_rows // SUBLANES

    def kernel(o_ref, t_ref, psum_ref, psumsq_ref):
        d = o_ref[...].astype(jnp.float32) - t_ref[...].astype(jnp.float32)
        l = d * d
        # Padded elements (if any) have o == t == 0 -> l == 0 -> no effect.
        l3 = l.reshape(groups, SUBLANES, LANES)          # layout-preserving split
        psum_ref[...] = jnp.sum(l3, axis=0)[None]        # (1, 8, 128) partial
        psumsq_ref[...] = jnp.sum(l3 * l3, axis=0)[None]

    return kernel


def _make_masked_kernel(tile_rows, n_valid, n_padded):
    groups = tile_rows // SUBLANES
    need_pad_mask = n_valid != n_padded                  # static python bool

    def kernel(thr_ref, o_ref, t_ref, pmsum_ref, pcnt_ref):
        d = o_ref[...].astype(jnp.float32) - t_ref[...].astype(jnp.float32)
        l = d * d
        keep = l < thr_ref[0]                            # SMEM scalar broadcast
        if need_pad_mask:
            row0 = pl.program_id(0) * tile_rows
            rid = jax.lax.broadcasted_iota(jnp.int32, (tile_rows, LANES), 0)
            cid = jax.lax.broadcasted_iota(jnp.int32, (tile_rows, LANES), 1)
            flat = (row0 + rid) * LANES + cid
            keep = jnp.logical_and(keep, flat < n_valid)
        msum3 = jnp.where(keep, l, 0.0).reshape(groups, SUBLANES, LANES)
        cnt3 = keep.astype(jnp.float32).reshape(groups, SUBLANES, LANES)
        pmsum_ref[...] = jnp.sum(msum3, axis=0)[None]
        pcnt_ref[...] = jnp.sum(cnt3, axis=0)[None]

    return kernel


@functools.partial(jax.jit, static_argnames=("max_tile_rows",))
def loss_mean_std(outputs, targets, *, max_tile_rows=1024):
    """Returns (loss[mask].mean(), kept_fraction) — LossMeanStd forward."""
    assert outputs.shape == targets.shape
    n_elems = outputs.size
    assert n_elems > 0

    rows = -(-n_elems // LANES)                                  # cdiv
    tile_rows = max(
        SUBLANES,
        (min(max_tile_rows, _round_up(rows, SUBLANES)) // SUBLANES) * SUBLANES,
    )
    num_tiles = _round_up(rows, tile_rows) // tile_rows
    rows_padded = num_tiles * tile_rows
    n_padded = rows_padded * LANES

    of = outputs.reshape(-1)
    tf = targets.reshape(-1)
    if n_padded != n_elems:
        # pad both with the same value -> padded loss == 0 (no effect on sums)
        of = jnp.pad(of, (0, n_padded - n_elems))
        tf = jnp.pad(tf, (0, n_padded - n_elems))
    o2 = of.reshape(rows_padded, LANES)
    t2 = tf.reshape(rows_padded, LANES)

    cparams = pltpu.CompilerParams(
        dimension_semantics=("parallel",),      # blocks independent -> 2 TCs on v7x
        vmem_limit_bytes=32 * 1024 * 1024,      # tiles (<=1 MiB/buffer) fit easily
    )
    partial_shape = jax.ShapeDtypeStruct((num_tiles, SUBLANES, LANES), jnp.float32)

    # ---- Pass 1: per-block partial sums of loss and loss^2 -------------------
    in_tile1 = pl.BlockSpec((tile_rows, LANES), lambda i: (i, 0))
    out_tile1 = pl.BlockSpec((1, SUBLANES, LANES), lambda i: (i, 0, 0))
    psum, psumsq = pl.pallas_call(
        _make_stats_kernel(tile_rows),
        out_shape=(partial_shape, partial_shape),
        grid_spec=pltpu.PrefetchScalarGridSpec(
            num_scalar_prefetch=0,
            grid=(num_tiles,),
            in_specs=[in_tile1, in_tile1],
            out_specs=[out_tile1, out_tile1],
        ),
        compiler_params=cparams,
    )(o2, t2)

    n = jnp.float32(n_elems)
    s = jnp.sum(psum, dtype=jnp.float32)
    ss = jnp.sum(psumsq, dtype=jnp.float32)
    mean = s / n
    var = (ss - n * mean * mean) / (n - 1.0)    # torch.std_mean: unbiased (N-1)
    std = jnp.sqrt(jnp.maximum(var, 0.0))
    thr = (1.5 * std + mean).reshape(1).astype(jnp.float32)

    # ---- Pass 2: masked partial sums + counts (loss recomputed in-kernel) ----
    in_tile2 = pl.BlockSpec((tile_rows, LANES), lambda i, thr_ref: (i, 0))
    out_tile2 = pl.BlockSpec((1, SUBLANES, LANES), lambda i, thr_ref: (i, 0, 0))
    pmsum, pcnt = pl.pallas_call(
        _make_masked_kernel(tile_rows, n_elems, n_padded),
        out_shape=(partial_shape, partial_shape),
        grid_spec=pltpu.PrefetchScalarGridSpec(
            num_scalar_prefetch=1,              # threshold lives in SMEM
            grid=(num_tiles,),
            in_specs=[in_tile2, in_tile2],
            out_specs=[out_tile2, out_tile2],
        ),
        compiler_params=cparams,
    )(thr, o2, t2)

    msum = jnp.sum(pmsum, dtype=jnp.float32)
    cnt = jnp.sum(pcnt, dtype=jnp.float32)
    masked_mean = msum / cnt                    # NaN if mask empty (matches torch)
    kept_fraction = cnt / n
    return masked_mean, kept_fraction


def _reference(outputs, targets):
    loss = (outputs - targets) ** 2
    mean = jnp.mean(loss)
    std = jnp.std(loss, ddof=1)
    mask = loss < 1.5 * std + mean
    masked_mean = jnp.sum(jnp.where(mask, loss, 0.0)) / jnp.sum(mask)
    frac = jnp.mean(mask.astype(jnp.float32))
    return masked_mean, frac


if __name__ == "__main__":
    key = jax.random.PRNGKey(0)
    k1, k2, k3, k4 = jax.random.split(key, 4)

    # NCHW-shaped synthetic outputs / targets (lane-aligned case)
    outputs = jax.random.normal(k1, (2, 4, 16, 16), dtype=jnp.float32)
    targets = jax.random.normal(k2, (2, 4, 16, 16), dtype=jnp.float32)
    result, frac = loss_mean_std(outputs, targets)
    jax.block_until_ready((result, frac))
    ref_m, ref_f = _reference(outputs, targets)
    assert jnp.allclose(result, ref_m, rtol=1e-5, atol=1e-5), (result, ref_m)
    assert jnp.allclose(frac, ref_f, rtol=1e-5, atol=1e-6), (frac, ref_f)

    # Odd-sized case exercising the padding / element-validity path
    o_odd = jax.random.normal(k3, (2, 3, 5, 7), dtype=jnp.float32)
    t_odd = jax.random.normal(k4, (2, 3, 5, 7), dtype=jnp.float32)
    result2, frac2 = loss_mean_std(o_odd, t_odd)
    jax.block_until_ready((result2, frac2))
    ref_m2, ref_f2 = _reference(o_odd, t_odd)
    assert jnp.allclose(result2, ref_m2, rtol=1e-5, atol=1e-5), (result2, ref_m2)
    assert jnp.allclose(frac2, ref_f2, rtol=1e-5, atol=1e-6), (frac2, ref_f2)

    print("KERNEL_OK")
</pallas_src>

<mosaic_0001>
module attributes {stable_mosaic.version = 11 : i64} {
  func.func @kernel(%arg0: i32, %arg1: memref<16x128xf32, #tpu.memory_space<vmem>>, %arg2: memref<16x128xf32, #tpu.memory_space<vmem>>, %arg3: memref<1x8x128xf32, #tpu.memory_space<vmem>>, %arg4: memref<1x8x128xf32, #tpu.memory_space<vmem>>) attributes {dimension_semantics = [#tpu.dimension_semantics<parallel>], iteration_bounds = array<i64: 1>, scalar_prefetch = 0 : i64, scratch_operands = 0 : i64, tpu.core_type = #tpu.core_type<tc>, window_params = [{transform_indices = @transform_0, window_bounds = array<i64: 16, 128>}, {transform_indices = @transform_1, window_bounds = array<i64: 16, 128>}, {transform_indices = @transform_2, window_bounds = array<i64: 1, 8, 128>}, {transform_indices = @transform_3, window_bounds = array<i64: 1, 8, 128>}]} {
    %c0 = arith.constant 0 : index
    %c0_0 = arith.constant 0 : index
    %0 = vector.load %arg1[%c0, %c0_0] : memref<16x128xf32, #tpu.memory_space<vmem>>, vector<16x128xf32>
    %c0_1 = arith.constant 0 : index
    %c0_2 = arith.constant 0 : index
    %1 = vector.load %arg2[%c0_1, %c0_2] : memref<16x128xf32, #tpu.memory_space<vmem>>, vector<16x128xf32>
    %2 = arith.subf %0, %1 : vector<16x128xf32>
    %3 = arith.mulf %2, %2 : vector<16x128xf32>
    %4 = vector.shape_cast %3 : vector<16x128xf32> to vector<2x8x128xf32>
    %cst = arith.constant dense<0.000000e+00> : vector<8x128xf32>
    %5 = vector.multi_reduction <add>, %4, %cst [0] : vector<2x8x128xf32> to vector<8x128xf32>
    %6 = vector.shape_cast %5 : vector<8x128xf32> to vector<1x8x128xf32>
    %c0_3 = arith.constant 0 : index
    %c0_4 = arith.constant 0 : index
    %c0_5 = arith.constant 0 : index
    %7 = vector.load %arg3[%c0_3, %c0_4, %c0_5] : memref<1x8x128xf32, #tpu.memory_space<vmem>>, vector<1x8x128xf32>
    tpu.vector_store %arg3[%c0_3, %c0_4, %c0_5], %6 {strides = array<i32>} : memref<1x8x128xf32, #tpu.memory_space<vmem>>, vector<1x8x128xf32>,
    %8 = arith.mulf %4, %4 : vector<2x8x128xf32>
    %cst_6 = arith.constant dense<0.000000e+00> : vector<8x128xf32>
    %9 = vector.multi_reduction <add>, %8, %cst_6 [0] : vector<2x8x128xf32> to vector<8x128xf32>
    %10 = vector.shape_cast %9 : vector<8x128xf32> to vector<1x8x128xf32>
    %c0_7 = arith.constant 0 : index
    %c0_8 = arith.constant 0 : index
    %c0_9 = arith.constant 0 : index
    %11 = vector.load %arg4[%c0_7, %c0_8, %c0_9] : memref<1x8x128xf32, #tpu.memory_space<vmem>>, vector<1x8x128xf32>
    tpu.vector_store %arg4[%c0_7, %c0_8, %c0_9], %10 {strides = array<i32>} : memref<1x8x128xf32, #tpu.memory_space<vmem>>, vector<1x8x128xf32>,
    return
  }
  func.func @transform_0(%arg0: i32) -> (i32, i32) {
    %c0_i32 = arith.constant 0 : i32
    %c0_i32_0 = arith.constant 0 : i32
    return %arg0, %c0_i32 : i32, i32
  }
  func.func @transform_1(%arg0: i32) -> (i32, i32) {
    %c0_i32 = arith.constant 0 : i32
    %c0_i32_0 = arith.constant 0 : i32
    return %arg0, %c0_i32 : i32, i32
  }
  func.func @transform_2(%arg0: i32) -> (i32, i32, i32) {
    %c0_i32 = arith.constant 0 : i32
    %c0_i32_0 = arith.constant 0 : i32
    %c0_i32_1 = arith.constant 0 : i32
    return %arg0, %c0_i32, %c0_i32_0 : i32, i32, i32
  }
  func.func @transform_3(%arg0: i32) -> (i32, i32, i32) {
    %c0_i32 = arith.constant 0 : i32
    %c0_i32_0 = arith.constant 0 : i32
    %c0_i32_1 = arith.constant 0 : i32
    return %arg0, %c0_i32, %c0_i32_0 : i32, i32, i32
  }
}

module attributes {stable_mosaic.version = 11 : i64} {
  func.func @kernel(%arg0: i32, %arg1: memref<1xf32, #tpu.memory_space<smem>>, %arg2: memref<16x128xf32, #tpu.memory_space<vmem>>, %arg3: memref<16x128xf32, #tpu.memory_space<vmem>>, %arg4: memref<1x8x128xf32, #tpu.memory_space<vmem>>, %arg5: memref<1x8x128xf32, #tpu.memory_space<vmem>>) attributes {dimension_semantics = [#tpu.dimension_semantics<parallel>], iteration_bounds = array<i64: 1>, scalar_prefetch = 1 : i64, scratch_operands = 0 : i64, tpu.core_type = #tpu.core_type<tc>, window_params = [{transform_indices = @transform_0, window_bounds = array<i64: 16, 128>}, {transform_indices = @transform_1, window_bounds = array<i64: 16, 128>}, {transform_indices = @transform_2, window_bounds = array<i64: 1, 8, 128>}, {transform_indices = @transform_3, window_bounds = array<i64: 1, 8, 128>}]} {
    %c0 = arith.constant 0 : index
    %c0_0 = arith.constant 0 : index
    %0 = vector.load %arg2[%c0, %c0_0] : memref<16x128xf32, #tpu.memory_space<vmem>>, vector<16x128xf32>
    %c0_1 = arith.constant 0 : index
    %c0_2 = arith.constant 0 : index
    %1 = vector.load %arg3[%c0_1, %c0_2] : memref<16x128xf32, #tpu.memory_space<vmem>>, vector<16x128xf32>
    %2 = arith.subf %0, %1 : vector<16x128xf32>
    %3 = arith.mulf %2, %2 : vector<16x128xf32>
    %c0_3 = arith.constant 0 : index
    %4 = memref.load %arg1[%c0_3] : memref<1xf32, #tpu.memory_space<smem>>
    %5 = vector.broadcast %4 : f32 to vector<16x128xf32>
    %6 = arith.cmpf olt, %3, %5 : vector<16x128xf32>
    %cst = arith.constant 0.000000e+00 : f32
    %7 = vector.broadcast %cst : f32 to vector<16x128xf32>
    %8 = arith.select %6, %3, %7 : vector<16x128xi1>, vector<16x128xf32>
    %9 = vector.shape_cast %8 : vector<16x128xf32> to vector<2x8x128xf32>
    %10 = arith.extui %6 : vector<16x128xi1> to vector<16x128xi32>
    %11 = arith.sitofp %10 : vector<16x128xi32> to vector<16x128xf32>
    %12 = vector.shape_cast %11 : vector<16x128xf32> to vector<2x8x128xf32>
    %cst_4 = arith.constant dense<0.000000e+00> : vector<8x128xf32>
    %13 = vector.multi_reduction <add>, %9, %cst_4 [0] : vector<2x8x128xf32> to vector<8x128xf32>
    %14 = vector.shape_cast %13 : vector<8x128xf32> to vector<1x8x128xf32>
    %c0_5 = arith.constant 0 : index
    %c0_6 = arith.constant 0 : index
    %c0_7 = arith.constant 0 : index
    %15 = vector.load %arg4[%c0_5, %c0_6, %c0_7] : memref<1x8x128xf32, #tpu.memory_space<vmem>>, vector<1x8x128xf32>
    tpu.vector_store %arg4[%c0_5, %c0_6, %c0_7], %14 {strides = array<i32>} : memref<1x8x128xf32, #tpu.memory_space<vmem>>, vector<1x8x128xf32>,
    %cst_8 = arith.constant dense<0.000000e+00> : vector<8x128xf32>
    %16 = vector.multi_reduction <add>, %12, %cst_8 [0] : vector<2x8x128xf32> to vector<8x128xf32>
    %17 = vector.shape_cast %16 : vector<8x128xf32> to vector<1x8x128xf32>
    %c0_9 = arith.constant 0 : index
    %c0_10 = arith.constant 0 : index
    %c0_11 = arith.constant 0 : index
    %18 = vector.load %arg5[%c0_9, %c0_10, %c0_11] : memref<1x8x128xf32, #tpu.memory_space<vmem>>, vector<1x8x128xf32>
    tpu.vector_store %arg5[%c0_9, %c0_10, %c0_11], %17 {strides = array<i32>} : memref<1x8x128xf32, #tpu.memory_space<vmem>>, vector<1x8x128xf32>,
    return
  }
  func.func @transform_0(%arg0: i32, %arg1: memref<1xf32, #tpu.memory_space<smem>>) -> (i32, i32) {
    %c0_i32 = arith.constant 0 : i32
    %c0_i32_0 = arith.constant 0 : i32
    return %arg0, %c0_i32 : i32, i32
  }
  func.func @transform_1(%arg0: i32, %arg1: memref<1xf32, #tpu.memory_space<smem>>) -> (i32, i32) {
    %c0_i32 = arith.constant 0 : i32
    %c0_i32_0 = arith.constant 0 : i32
    return %arg0, %c0_i32 : i32, i32
  }
  func.func @transform_2(%arg0: i32, %arg1: memref<1xf32, #tpu.memory_space<smem>>) -> (i32, i32, i32) {
    %c0_i32 = arith.constant 0 : i32
    %c0_i32_0 = arith.constant 0 : i32
    %c0_i32_1 = arith.constant 0 : i32
    return %arg0, %c0_i32, %c0_i32_0 : i32, i32, i32
  }
  func.func @transform_3(%arg0: i32, %arg1: memref<1xf32, #tpu.memory_space<smem>>) -> (i32, i32, i32) {
    %c0_i32 = arith.constant 0 : i32
    %c0_i32_0 = arith.constant 0 : i32
    %c0_i32_1 = arith.constant 0 : i32
    return %arg0, %c0_i32, %c0_i32_0 : i32, i32, i32
  }
}

</mosaic_0001>

<llo_original>
// kernel: loss_mean_std.2
$region0: #{loss_mean_std.2}
  #allocation0 [shape = 'u32[]', space=smem, size = 0x4, offset = 0x4, fixed_abs, tag = 'smem constant byte address 0x4 - core index']
  #allocation1 [shape = 'u32[72,128]{1,0:T(1,128)}', space=vmem, size = 0x9000, scoped, tag = 'internal scratch']
  %s0 = inlined_call_operand.vmem [shape: f32[16,128], index: 0, kind: input, shape index: {}]
  %s1 = inlined_call_operand.vmem [shape: f32[16,128], index: 1, kind: input, shape index: {}]
  %s2 = inlined_call_operand.vmem [shape: f32[1,8,128], index: 2, kind: output, shape index: {0}]
  %s3 = inlined_call_operand.vmem [shape: f32[1,8,128], index: 3, kind: output, shape index: {1}]
  %4 = xla_tuple %s2, %s3
  %s5 = sld [smem:[#allocation0]]
  $region26: #{loss_mean_std.2} parent=0
    _
  %s7 = ssub.s32 1, %s5
  %s8 = scalar_select 0, %s7, %s5
  // Predicated region
  $region2: #{loss_mean_std.2} parent=0 // pred_check
    _
  $region3: #{loss_mean_std.2} parent=0 // pred_check_branch
    %10 = sbr.rel (0) target = $region5
  $region4: #{loss_mean_std.2} parent=0 // pred_region
    _
  $region5: #{loss_mean_std.2} parent=0 // pred_fallthru
    _
  // Predicated region
  $region6: #{loss_mean_std.2} parent=0 // pred_check
    _
  $region7: #{loss_mean_std.2} parent=0 // pred_check_branch
    %12 = sbr.rel (0) target = $region9
  $region8: #{loss_mean_std.2} parent=0 // pred_region
    _
  $region9: #{loss_mean_std.2} parent=0 // pred_fallthru
    _
  %v13 = vld [vmem:[%s0] sm:$0xff]
  %v14 = vld [vmem:[%s0 + $0x8] sm:$0xff]
  %v15 = vld [vmem:[%s1] sm:$0xff]
  %v16 = vld [vmem:[%s1 + $0x8] sm:$0xff]
  %v17 = vsub.f32 %v13, %v15
  %v18 = vsub.f32 %v14, %v16
  %v19 = vmul.f32 %v17, %v17
  %v20 = vmul.f32 %v18, %v18
  %v21 = vadd.f32 %v19, %v20
  %22 = vst [vmem:[%s2] sm:$0xff] %v21
  %v23 = vmul.f32 %v19, %v19
  %v24 = vmul.f32 %v20, %v20
  %v25 = vadd.f32 %v23, %v24
  %26 = vst [vmem:[%s3] sm:$0xff] %v25
  // Predicated region
  $region10: #{loss_mean_std.2} parent=0 // pred_check
    _
  $region11: #{loss_mean_std.2} parent=0 // pred_check_branch
    %28 = sbr.rel (0) target = $region13
  $region12: #{loss_mean_std.2} parent=0 // pred_region
    _
  $region13: #{loss_mean_std.2} parent=0 // pred_fallthru
    _
  // Predicated region
  $region14: #{loss_mean_std.2} parent=0 // pred_check
    _
  $region15: #{loss_mean_std.2} parent=0 // pred_check_branch
    %30 = sbr.rel (0) target = $region17
  $region16: #{loss_mean_std.2} parent=0 // pred_region
    _
  $region17: #{loss_mean_std.2} parent=0 // pred_fallthru
    _
  // Predicated region
  $region18: #{loss_mean_std.2} parent=0 // pred_check
    _
  $region19: #{loss_mean_std.2} parent=0 // pred_check_branch
    %32 = sbr.rel (0) target = $region21
  $region20: #{loss_mean_std.2} parent=0 // pred_region
    _
  $region21: #{loss_mean_std.2} parent=0 // pred_fallthru
    _
  // Predicated region
  $region22: #{loss_mean_std.2} parent=0 // pred_check
    _
  $region23: #{loss_mean_std.2} parent=0 // pred_check_branch
    %34 = sbr.rel (0) target = $region25
  $region24: #{loss_mean_std.2} parent=0 // pred_region
    _
  $region25: #{loss_mean_std.2} parent=0 // pred_fallthru
    _

// kernel: loss_mean_std.3
$region0: #{loss_mean_std.3}
  #allocation0 [shape = 'u32[]', space=smem, size = 0x4, offset = 0x4, fixed_abs, tag = 'smem constant byte address 0x4 - core index']
  #allocation1 [shape = 'u32[72,128]{1,0:T(1,128)}', space=vmem, size = 0x9000, scoped, tag = 'internal scratch']
  #allocation2 [shape = 's32[1]{0}', space=sflag, size = 0x4, scoped, tag = 'scoped memory for loss_mean_std.3']
  #allocation3 [shape = 'f32[1]{0:T(128)S(6)}', space=smem, size = 0x200, scoped, tag = 'prefetched SMEM operand 0']
  %s0 = inlined_call_operand.<no memory space> [shape: f32[1], index: 0, kind: input, shape index: {}]
  %s1 = inlined_call_operand.vmem [shape: f32[16,128], index: 1, kind: input, shape index: {}]
  %s2 = inlined_call_operand.vmem [shape: f32[16,128], index: 2, kind: input, shape index: {}]
  %s3 = inlined_call_operand.vmem [shape: f32[1,8,128], index: 3, kind: output, shape index: {0}]
  %s4 = inlined_call_operand.vmem [shape: f32[1,8,128], index: 4, kind: output, shape index: {1}]
  %5 = xla_tuple %s3, %s4
  %s6 = sld [smem:[#allocation0]]
  $region26: #{loss_mean_std.3} parent=0
    _
  %s8 = ssub.s32 1, %s6
  %s9 = scalar_select 0, %s8, %s6
  %10 = sst [smem:[#allocation3]] %s0
  // Predicated region
  $region2: #{loss_mean_std.3} parent=0 // pred_check
    _
  $region3: #{loss_mean_std.3} parent=0 // pred_check_branch
    %12 = sbr.rel (0) target = $region5
  $region4: #{loss_mean_std.3} parent=0 // pred_region
    _
  $region5: #{loss_mean_std.3} parent=0 // pred_fallthru
    _
  // Predicated region
  $region6: #{loss_mean_std.3} parent=0 // pred_check
    _
  $region7: #{loss_mean_std.3} parent=0 // pred_check_branch
    %14 = sbr.rel (0) target = $region9
  $region8: #{loss_mean_std.3} parent=0 // pred_region
    _
  $region9: #{loss_mean_std.3} parent=0 // pred_fallthru
    _
  %v15 = vld [vmem:[%s1] sm:$0xff]
  %v16 = vld [vmem:[%s1 + $0x8] sm:$0xff]
  %v17 = vld [vmem:[%s2] sm:$0xff]
  %v18 = vld [vmem:[%s2 + $0x8] sm:$0xff]
  %v19 = vsub.f32 %v15, %v17
  %v20 = vsub.f32 %v16, %v18
  %v21 = vmul.f32 %v19, %v19
  %v22 = vmul.f32 %v20, %v20
  %s23 = sld [smem:[#allocation3]]
  %v24 = vstv %s23
  %vm25 = vcmp.lt.f32.partialorder %v21, %v24
  %vm26 = vcmp.lt.f32.partialorder %v22, %v24
  %v27 = vsel %vm25, %v21, 0.0
  %v28 = vsel %vm26, %v22, 0.0
  %v29 = vsel %vm25, 1, 0
  %v30 = vsel %vm26, 1, 0
  %v31 = vcvt.s32.f32 %v29
  %v32 = vcvt.s32.f32 %v30
  %v33 = vadd.f32 %v27, %v28
  %34 = vst [vmem:[%s3] sm:$0xff] %v33
  %v35 = vadd.f32 %v31, %v32
  %36 = vst [vmem:[%s4] sm:$0xff] %v35
  // Predicated region
  $region10: #{loss_mean_std.3} parent=0 // pred_check
    _
  $region11: #{loss_mean_std.3} parent=0 // pred_check_branch
    %38 = sbr.rel (0) target = $region13
  $region12: #{loss_mean_std.3} parent=0 // pred_region
    _
  $region13: #{loss_mean_std.3} parent=0 // pred_fallthru
    _
  // Predicated region
  $region14: #{loss_mean_std.3} parent=0 // pred_check
    _
  $region15: #{loss_mean_std.3} parent=0 // pred_check_branch
    %40 = sbr.rel (0) target = $region17
  $region16: #{loss_mean_std.3} parent=0 // pred_region
    _
  $region17: #{loss_mean_std.3} parent=0 // pred_fallthru
    _
  // Predicated region
  $region18: #{loss_mean_std.3} parent=0 // pred_check
    _
  $region19: #{loss_mean_std.3} parent=0 // pred_check_branch
    %42 = sbr.rel (0) target = $region21
  $region20: #{loss_mean_std.3} parent=0 // pred_region
    _
  $region21: #{loss_mean_std.3} parent=0 // pred_fallthru
    _
  // Predicated region
  $region22: #{loss_mean_std.3} parent=0 // pred_check
    _
  $region23: #{loss_mean_std.3} parent=0 // pred_check_branch
    %44 = sbr.rel (0) target = $region25
  $region24: #{loss_mean_std.3} parent=0 // pred_region
    _
  $region25: #{loss_mean_std.3} parent=0 // pred_fallthru
    _

</llo_original>
